<compile_context>
chip_gen: v5e
topology: v5e:2x2
jax: 0.10.0
libtpu: 0.0.40
codegen_flags: <defaults>
</compile_context>

<pallas_src>
import functools

import numpy as np
import jax
import jax.numpy as jnp
from jax import lax
from jax.experimental import pallas as pl
from jax.experimental.pallas import tpu as pltpu


def _round_up(x: int, m: int) -> int:
    return ((x + m - 1) // m) * m


def _pick_tile(n: int, cap: int, multiples) -> int:
    """Largest t <= cap with t % m == 0 (preferring earlier m) and n % t == 0."""
    cap = max(int(cap), 1)
    for m in multiples:
        t = (min(cap, n) // m) * m
        while t >= m:
            if n % t == 0:
                return t
            t -= m
    return n


def _vmem_physical_bytes() -> int:
    """Per-TensorCore VMEM capacity; conservative fallback if the query fails."""
    try:
        info = pltpu.get_tpu_info()
        cap = int(getattr(info, "vmem_capacity_bytes", 0))
        if cap > 0:
            return cap
    except Exception:
        pass
    return 64 * 1024 * 1024   # v7x per-TC VMEM — safe lower bound everywhere


def _make_kernel(tm: int, tn: int, n_real: int, inv_temp: float,
                 num_col_tiles: int, cols_resident: bool):
    """All closed-over values are Python scalars (no captured jnp constants)."""

    def kernel(rows_ref, cols_ref, pos_ref, ce_ref, p0_ref, m_ref, l_ref):
        i = pl.program_id(0)
        j = pl.program_id(1)

        @pl.when(j == 0)
        def _init():
            m_ref[...] = jnp.full((tm, 1), -jnp.inf, dtype=jnp.float32)
            l_ref[...] = jnp.zeros((tm, 1), dtype=jnp.float32)

        if cols_resident:
            # Whole (N_pad, d_pad) operand is VMEM-resident; slice this column tile.
            col0 = pl.multiple_of(j * tn, tn)
            cols = cols_ref[pl.ds(col0, tn), :]
        else:
            cols = cols_ref[...]

        # (tm, d) · (tn, d)ᵀ on the MXU, f32 accumulation — no XLU transpose.
        s = lax.dot_general(
            rows_ref[...], cols,
            dimension_numbers=(((1,), (1,)), ((), ())),
            preferred_element_type=jnp.float32) * inv_temp

        # Exact self-similarity mask + padded-column mask from two thin iotas.
        row_ids = i * tm + lax.broadcasted_iota(jnp.int32, (tm, 1), 0)
        col_ids = j * tn + lax.broadcasted_iota(jnp.int32, (1, tn), 1)
        dead = (row_ids == col_ids) | (col_ids >= n_real)
        s = jnp.where(dead, -1e30, s)

        # Online-softmax update over this column tile.
        m_prev = m_ref[...]
        m_new = jnp.maximum(m_prev, jnp.max(s, axis=-1, keepdims=True))
        l_ref[...] = (jnp.exp(m_prev - m_new) * l_ref[...]
                      + jnp.sum(jnp.exp(s - m_new), axis=-1, keepdims=True))
        m_ref[...] = m_new

        @pl.when(j == num_col_tiles - 1)
        def _finalize():
            pos = pos_ref[...]                       # f32, already scaled by 1/T
            m = m_ref[...]
            log_l = jnp.log(l_ref[...])
            # CrossEntropy with label 0 (positive column) and softmax[:, 0] (exact).
            ce_ref[...] = (m - pos) + log_l
            p0_ref[...] = jnp.exp(pos - m - log_l)

    return kernel


@functools.partial(jax.jit, static_argnames=(
    "batch_size", "temperature", "use_cosine_similarity", "mm_dtype",
    "max_tile_m", "max_tile_n", "cols_resident"))
def ntxent_loss_poly(zis, zjs, *, batch_size, temperature, use_cosine_similarity,
                     mm_dtype=jnp.bfloat16, max_tile_m=512, max_tile_n=512,
                     cols_resident=None):
    """Forward pass of NTXentLoss_poly(zis, zjs).

    mm_dtype is the MXU operand dtype (bf16 default; accumulation & softmax stats
    stay f32, positives are computed in f32). Pass jnp.float32 for tight parity
    with the PyTorch module.
    """
    B = int(batch_size)
    N = 2 * B
    D = zis.shape[-1]
    inv_temp = 1.0 / float(temperature)

    zis = zis.astype(jnp.float32)
    zjs = zjs.astype(jnp.float32)
    if use_cosine_similarity:
        # Row pre-normalization == torch's x·y / max(|x||y|, 1e-8) except for
        # degenerate near-zero-norm rows.
        def _normalize(x):
            nrm = jnp.sqrt(jnp.sum(x * x, axis=-1, keepdims=True))
            return x / jnp.maximum(nrm, 1e-8)
        zis = _normalize(zis)
        zjs = _normalize(zjs)

    # representations = concat([zjs, zis]); each row's positive partner is the
    # representations rolled by B.  Positive logits are precomputed here in f32
    # (tiny O(N·D) op) so the kernel needs no partner tiles.
    reps = jnp.concatenate([zjs, zis], axis=0)                      # (N, D) f32
    partner = jnp.concatenate([zis, zjs], axis=0)                   # (N, D) f32
    pos = (jnp.sum(reps * partner, axis=-1, keepdims=True)
           * inv_temp).astype(jnp.float32)                          # (N, 1)

    # Pad features to a lane-dense multiple of 128 and rows to a multiple of 128
    # (zero rows/cols don't change dot products; padded columns are masked in the
    # kernel and padded rows are sliced off before the final sums).
    d_pad = _round_up(max(D, 128), 128)
    n_pad = _round_up(max(N, 128), 128)
    if d_pad != D:
        reps = jnp.pad(reps, ((0, 0), (0, d_pad - D)))
    if n_pad != N:
        reps = jnp.pad(reps, ((0, n_pad - N), (0, 0)))
        pos = jnp.pad(pos, ((0, n_pad - N), (0, 0)))
    reps_mm = reps.astype(mm_dtype)

    # ---- VMEM-budget-driven tile planning (generation-aware). ----------------
    mm_bytes = int(np.dtype(mm_dtype).itemsize)
    sub_mult = max(8, 32 // mm_bytes)              # 8 for f32, 16 for bf16
    vmem_phys = _vmem_physical_bytes()             # 128 MiB v5e/v6e, 64 MiB v7x
    vmem_limit = int(vmem_phys * 3 // 4)           # leave compiler headroom
    budget = int(vmem_limit * 0.6)                 # headroom for s-tile temporaries

    # Column operand: resident single block (DMA'd once) when it fits; otherwise
    # streamed (tn, d_pad) tiles re-fetched once per row tile.
    cols_resident_bytes = 2 * n_pad * d_pad * mm_bytes   # buffer allocation bound
    if cols_resident is None:
        cols_resident = bool(cols_resident_bytes <= budget // 2)
    tn = _pick_tile(n_pad, max_tile_n, (128, 8))
    cols_bytes = cols_resident_bytes if cols_resident else 2 * tn * d_pad * mm_bytes

    # Grow the row tile as large as the remaining budget allows; the column
    # operand is re-streamed (N_pad/tm) times when not resident, so bigger tm
    # directly cuts HBM traffic.  Cap at N_pad//2 so the "parallel" row axis
    # spans both v7x TensorCores.
    rows_budget = max(budget - cols_bytes, 2 * sub_mult * d_pad * mm_bytes)
    tm_cap = rows_budget // (2 * d_pad * mm_bytes)
    tm_cap = min(tm_cap, int(max_tile_m), max(n_pad // 2, sub_mult))
    tm = _pick_tile(n_pad, max(tm_cap, sub_mult), (sub_mult,))

    grid = (n_pad // tm, n_pad // tn)

    if cols_resident:
        cols_spec = pl.BlockSpec((n_pad, d_pad), lambda i, j: (0, 0))
    else:
        cols_spec = pl.BlockSpec((tn, d_pad), lambda i, j: (j, 0))

    kernel = _make_kernel(tm, tn, N, inv_temp, grid[1], cols_resident)

    ce_rows, p0 = pl.pallas_call(
        kernel,
        out_shape=(jax.ShapeDtypeStruct((n_pad, 1), jnp.float32),
                   jax.ShapeDtypeStruct((n_pad, 1), jnp.float32)),
        grid_spec=pltpu.PrefetchScalarGridSpec(
            num_scalar_prefetch=0,
            grid=grid,
            in_specs=[
                pl.BlockSpec((tm, d_pad), lambda i, j: (i, 0)),   # row tile
                cols_spec,                                        # column operand
                pl.BlockSpec((tm, 1), lambda i, j: (i, 0)),       # positives (f32)
            ],
            out_specs=(
                pl.BlockSpec((tm, 1), lambda i, j: (i, 0)),
                pl.BlockSpec((tm, 1), lambda i, j: (i, 0)),
            ),
            scratch_shapes=[pltpu.VMEM((tm, 1), jnp.float32),     # running max
                            pltpu.VMEM((tm, 1), jnp.float32)]),   # running denom
        compiler_params=pltpu.CompilerParams(
            dimension_semantics=("parallel", "arbitrary"),
            vmem_limit_bytes=vmem_limit),
    )(reps_mm, reps_mm, pos)

    # Tiny O(N) final reduction in JAX (row axis is megacore-parallel, so a shared
    # scalar accumulator in scratch would race).  Padded rows are sliced off.
    ce = jnp.sum(ce_rows[:N])
    pt = jnp.sum(p0[:N]) / float(N * (N - 1))
    loss = ce / float(N) + float(B) * (1.0 / float(B) - pt)
    return loss


def ntxent_ref_np(zis, zjs, B, temperature, use_cosine):
    """Pure-numpy mirror of the PyTorch forward (for verification)."""
    zis = np.asarray(zis, np.float32)
    zjs = np.asarray(zjs, np.float32)
    reps = np.concatenate([zjs, zis], axis=0)
    N = 2 * B
    if use_cosine:
        nrm = np.linalg.norm(reps, axis=-1)
        sim = (reps @ reps.T) / np.maximum(np.outer(nrm, nrm), 1e-8)
    else:
        sim = reps @ reps.T
    l_pos = np.diag(sim, B)
    r_pos = np.diag(sim, -B)
    positives = np.concatenate([l_pos, r_pos]).reshape(N, 1)
    mask = (1 - (np.eye(N) + np.eye(N, k=B) + np.eye(N, k=-B))).astype(bool)
    negatives = sim[mask].reshape(N, -1)
    logits = np.concatenate([positives, negatives], axis=1) / temperature
    mx = logits.max(axis=-1, keepdims=True)
    e = np.exp(logits - mx)
    sm = e / e.sum(axis=-1, keepdims=True)
    CE = -np.sum(np.log(sm[:, 0]))
    pt = np.sum(sm[:, 0]) / (N * (N - 1))
    return CE / N + B * (1.0 / B - pt)


if __name__ == "__main__":
    batch_size = 8
    feat_dim = 32
    temperature = 0.5

    key = jax.random.PRNGKey(0)
    k1, k2 = jax.random.split(key)
    zis = jax.random.normal(k1, (batch_size, feat_dim), dtype=jnp.float32)
    zjs = jax.random.normal(k2, (batch_size, feat_dim), dtype=jnp.float32)

    ref_cos = ntxent_ref_np(zis, zjs, batch_size, temperature, True)
    ref_dot = ntxent_ref_np(zis, zjs, batch_size, temperature, False)

    # 1) Default config: bf16 MXU operands, f32 accumulation / softmax stats,
    #    VMEM-resident column operand (fits the budget at this size).
    loss_bf16 = jax.block_until_ready(ntxent_loss_poly(
        zis, zjs, batch_size=batch_size, temperature=temperature,
        use_cosine_similarity=True))
    np.testing.assert_allclose(np.asarray(loss_bf16), ref_cos, rtol=3e-2, atol=3e-2)

    # 2) f32 MXU path, cosine similarity: tight parity with the PyTorch module.
    loss_f32 = jax.block_until_ready(ntxent_loss_poly(
        zis, zjs, batch_size=batch_size, temperature=temperature,
        use_cosine_similarity=True, mm_dtype=jnp.float32))
    np.testing.assert_allclose(np.asarray(loss_f32), ref_cos, rtol=1e-3, atol=1e-3)

    # 3) f32, dot-product similarity branch.
    loss_dot = jax.block_until_ready(ntxent_loss_poly(
        zis, zjs, batch_size=batch_size, temperature=temperature,
        use_cosine_similarity=False, mm_dtype=jnp.float32))
    np.testing.assert_allclose(np.asarray(loss_dot), ref_dot, rtol=1e-3, atol=1e-3)

    # 4) Streamed-column path with multiple row and column tiles (exercises the
    #    online-softmax accumulation across column tiles and the diag mask).
    loss_stream = jax.block_until_ready(ntxent_loss_poly(
        zis, zjs, batch_size=batch_size, temperature=temperature,
        use_cosine_similarity=True, mm_dtype=jnp.float32,
        max_tile_m=32, max_tile_n=64, cols_resident=False))
    np.testing.assert_allclose(np.asarray(loss_stream), ref_cos, rtol=1e-3, atol=1e-3)

    # 5) Resident-column path with in-kernel dynamic column slicing.
    loss_res = jax.block_until_ready(ntxent_loss_poly(
        zis, zjs, batch_size=batch_size, temperature=temperature,
        use_cosine_similarity=True, mm_dtype=jnp.float32,
        max_tile_m=32, max_tile_n=64, cols_resident=True))
    np.testing.assert_allclose(np.asarray(loss_res), ref_cos, rtol=1e-3, atol=1e-3)

    print("KERNEL_OK")
</pallas_src>

<mosaic_0001>
module attributes {stable_mosaic.version = 11 : i64} {
  func.func @kernel(%arg0: i32, %arg1: i32, %arg2: memref<64x128xbf16, #tpu.memory_space<vmem>>, %arg3: memref<128x128xbf16, #tpu.memory_space<vmem>>, %arg4: memref<64x1xf32, #tpu.memory_space<vmem>>, %arg5: memref<64x1xf32, #tpu.memory_space<vmem>>, %arg6: memref<64x1xf32, #tpu.memory_space<vmem>>, %arg7: memref<64x1xf32, #tpu.memory_space<vmem>>, %arg8: memref<64x1xf32, #tpu.memory_space<vmem>>) attributes {dimension_semantics = [#tpu.dimension_semantics<parallel>, #tpu.dimension_semantics<arbitrary>], iteration_bounds = array<i64: 2, 1>, scalar_prefetch = 0 : i64, scratch_operands = 2 : i64, tpu.core_type = #tpu.core_type<tc>, window_params = [{transform_indices = @transform_0, window_bounds = array<i64: 64, 128>}, {pipeline_mode = #tpu.pipeline_mode<synchronous>, transform_indices = @transform_1, window_bounds = array<i64: 128, 128>}, {transform_indices = @transform_2, window_bounds = array<i64: 64, 1>}, {transform_indices = @transform_3, window_bounds = array<i64: 64, 1>}, {transform_indices = @transform_4, window_bounds = array<i64: 64, 1>}]} {
    %c0_i32 = arith.constant 0 : i32
    %0 = arith.cmpi eq, %arg1, %c0_i32 : i32
    %1 = arith.extui %0 : i1 to i32
    %c0_i32_0 = arith.constant 0 : i32
    %2 = arith.cmpi ne, %1, %c0_i32_0 : i32
    scf.if %2 {
      %cst_18 = arith.constant 0xFF800000 : f32
      %47 = vector.broadcast %cst_18 : f32 to vector<64x1xf32>
      %c0_19 = arith.constant 0 : index
      %c0_20 = arith.constant 0 : index
      %48 = vector.load %arg7[%c0_19, %c0_20] : memref<64x1xf32, #tpu.memory_space<vmem>>, vector<64x1xf32>
      tpu.vector_store %arg7[%c0_19, %c0_20], %47 {strides = array<i32>} : memref<64x1xf32, #tpu.memory_space<vmem>>, vector<64x1xf32>,
      %cst_21 = arith.constant 0.000000e+00 : f32
      %49 = vector.broadcast %cst_21 : f32 to vector<64x1xf32>
      %c0_22 = arith.constant 0 : index
      %c0_23 = arith.constant 0 : index
      %50 = vector.load %arg8[%c0_22, %c0_23] : memref<64x1xf32, #tpu.memory_space<vmem>>, vector<64x1xf32>
      tpu.vector_store %arg8[%c0_22, %c0_23], %49 {strides = array<i32>} : memref<64x1xf32, #tpu.memory_space<vmem>>, vector<64x1xf32>,
    } else {
    }
    %c128_i32 = arith.constant 128 : i32
    %3 = arith.muli %arg1, %c128_i32 : i32
    %4 = tpu.assume_multiple %3, 128 : i32
    %5 = arith.index_cast %4 : i32 to index
    %c0 = arith.constant 0 : index
    %6 = vector.load %arg3[%5, %c0] : memref<128x128xbf16, #tpu.memory_space<vmem>>, vector<128x128xbf16>
    %c0_1 = arith.constant 0 : index
    %c0_2 = arith.constant 0 : index
    %7 = vector.load %arg2[%c0_1, %c0_2] : memref<64x128xbf16, #tpu.memory_space<vmem>>, vector<64x128xbf16>
    %cst = arith.constant dense<0.000000e+00> : vector<64x128xf32>
    %8 = tpu.matmul %7, %6, %cst {dimension_numbers = #tpu.dot_dimension_numbers<[1], [1], [0], [0], [0, 0, 1, 0], [], []>} : vector<64x128xbf16>, vector<128x128xbf16>, vector<64x128xf32> -> vector<64x128xf32>
    %cst_3 = arith.constant 2.000000e+00 : f32
    %9 = vector.broadcast %cst_3 : f32 to vector<64x128xf32>
    %10 = arith.mulf %8, %9 : vector<64x128xf32>
    %c64_i32 = arith.constant 64 : i32
    %11 = arith.muli %arg0, %c64_i32 : i32
    %12 = tpu.iota {dimensions = array<i32: 0>} : vector<64x1xi32>
    %13 = vector.broadcast %11 : i32 to vector<64x1xi32>
    %14 = arith.addi %13, %12 : vector<64x1xi32>
    %c128_i32_4 = arith.constant 128 : i32
    %15 = arith.muli %arg1, %c128_i32_4 : i32
    %16 = tpu.iota {dimensions = array<i32: 1>} : vector<1x128xi32>
    %17 = vector.broadcast %15 : i32 to vector<1x128xi32>
    %18 = arith.addi %17, %16 : vector<1x128xi32>
    %19 = vector.broadcast %14 : vector<64x1xi32> to vector<64x128xi32>
    %20 = vector.broadcast %18 : vector<1x128xi32> to vector<64x128xi32>
    %21 = arith.cmpi eq, %19, %20 : vector<64x128xi32>
    %c16_i32 = arith.constant 16 : i32
    %22 = vector.broadcast %c16_i32 : i32 to vector<1x128xi32>
    %23 = arith.cmpi sge, %18, %22 : vector<1x128xi32>
    %24 = vector.broadcast %23 : vector<1x128xi1> to vector<64x128xi1>
    %25 = arith.ori %21, %24 : vector<64x128xi1>
    %cst_5 = arith.constant -1.000000e+30 : f32
    %26 = vector.broadcast %cst_5 : f32 to vector<64x128xf32>
    %27 = arith.select %25, %26, %10 : vector<64x128xi1>, vector<64x128xf32>
    %c0_6 = arith.constant 0 : index
    %c0_7 = arith.constant 0 : index
    %28 = vector.load %arg7[%c0_6, %c0_7] : memref<64x1xf32, #tpu.memory_space<vmem>>, vector<64x1xf32>
    %cst_8 = arith.constant dense<0xFF800000> : vector<64xf32>
    %29 = vector.multi_reduction <maximumf>, %27, %cst_8 [1] : vector<64x128xf32> to vector<64xf32>
    %30 = vector.shape_cast %29 : vector<64xf32> to vector<64x1xf32>
    %31 = arith.maximumf %28, %30 : vector<64x1xf32>
    %32 = arith.subf %28, %31 : vector<64x1xf32>
    %33 = math.exp %32 : vector<64x1xf32>
    %c0_9 = arith.constant 0 : index
    %c0_10 = arith.constant 0 : index
    %34 = vector.load %arg8[%c0_9, %c0_10] : memref<64x1xf32, #tpu.memory_space<vmem>>, vector<64x1xf32>
    %35 = arith.mulf %33, %34 : vector<64x1xf32>
    %36 = vector.broadcast %31 : vector<64x1xf32> to vector<64x128xf32>
    %37 = arith.subf %27, %36 : vector<64x128xf32>
    %38 = math.exp %37 : vector<64x128xf32>
    %cst_11 = arith.constant dense<0.000000e+00> : vector<64xf32>
    %39 = vector.multi_reduction <add>, %38, %cst_11 [1] : vector<64x128xf32> to vector<64xf32>
    %40 = vector.shape_cast %39 : vector<64xf32> to vector<64x1xf32>
    %41 = arith.addf %35, %40 : vector<64x1xf32>
    %c0_12 = arith.constant 0 : index
    %c0_13 = arith.constant 0 : index
    %42 = vector.load %arg8[%c0_12, %c0_13] : memref<64x1xf32, #tpu.memory_space<vmem>>, vector<64x1xf32>
    tpu.vector_store %arg8[%c0_12, %c0_13], %41 {strides = array<i32>} : memref<64x1xf32, #tpu.memory_space<vmem>>, vector<64x1xf32>,
    %c0_14 = arith.constant 0 : index
    %c0_15 = arith.constant 0 : index
    %43 = vector.load %arg7[%c0_14, %c0_15] : memref<64x1xf32, #tpu.memory_space<vmem>>, vector<64x1xf32>
    tpu.vector_store %arg7[%c0_14, %c0_15], %31 {strides = array<i32>} : memref<64x1xf32, #tpu.memory_space<vmem>>, vector<64x1xf32>,
    %c0_i32_16 = arith.constant 0 : i32
    %44 = arith.cmpi eq, %arg1, %c0_i32_16 : i32
    %45 = arith.extui %44 : i1 to i32
    %c0_i32_17 = arith.constant 0 : i32
    %46 = arith.cmpi ne, %45, %c0_i32_17 : i32
    scf.if %46 {
      %c0_18 = arith.constant 0 : index
      %c0_19 = arith.constant 0 : index
      %47 = vector.load %arg4[%c0_18, %c0_19] : memref<64x1xf32, #tpu.memory_space<vmem>>, vector<64x1xf32>
      %c0_20 = arith.constant 0 : index
      %c0_21 = arith.constant 0 : index
      %48 = vector.load %arg7[%c0_20, %c0_21] : memref<64x1xf32, #tpu.memory_space<vmem>>, vector<64x1xf32>
      %c0_22 = arith.constant 0 : index
      %c0_23 = arith.constant 0 : index
      %49 = vector.load %arg8[%c0_22, %c0_23] : memref<64x1xf32, #tpu.memory_space<vmem>>, vector<64x1xf32>
      %50 = math.log %49 : vector<64x1xf32>
      %51 = arith.subf %48, %47 : vector<64x1xf32>
      %52 = arith.addf %51, %50 : vector<64x1xf32>
      %c0_24 = arith.constant 0 : index
      %c0_25 = arith.constant 0 : index
      %53 = vector.load %arg5[%c0_24, %c0_25] : memref<64x1xf32, #tpu.memory_space<vmem>>, vector<64x1xf32>
      tpu.vector_store %arg5[%c0_24, %c0_25], %52 {strides = array<i32>} : memref<64x1xf32, #tpu.memory_space<vmem>>, vector<64x1xf32>,
      %54 = arith.subf %47, %48 : vector<64x1xf32>
      %55 = arith.subf %54, %50 : vector<64x1xf32>
      %56 = math.exp %55 : vector<64x1xf32>
      %c0_26 = arith.constant 0 : index
      %c0_27 = arith.constant 0 : index
      %57 = vector.load %arg6[%c0_26, %c0_27] : memref<64x1xf32, #tpu.memory_space<vmem>>, vector<64x1xf32>
      tpu.vector_store %arg6[%c0_26, %c0_27], %56 {strides = array<i32>} : memref<64x1xf32, #tpu.memory_space<vmem>>, vector<64x1xf32>,
    } else {
    }
    return
  }
  func.func @transform_0(%arg0: i32, %arg1: i32) -> (i32, i32) {
    %c0_i32 = arith.constant 0 : i32
    %c0_i32_0 = arith.constant 0 : i32
    return %arg0, %c0_i32 : i32, i32
  }
  func.func @transform_1(%arg0: i32, %arg1: i32) -> (i32, i32) {
    %c0_i32 = arith.constant 0 : i32
    %c0_i32_0 = arith.constant 0 : i32
    %c0_i32_1 = arith.constant 0 : i32
    return %c0_i32, %c0_i32_0 : i32, i32
  }
  func.func @transform_2(%arg0: i32, %arg1: i32) -> (i32, i32) {
    %c0_i32 = arith.constant 0 : i32
    %c0_i32_0 = arith.constant 0 : i32
    return %arg0, %c0_i32 : i32, i32
  }
  func.func @transform_3(%arg0: i32, %arg1: i32) -> (i32, i32) {
    %c0_i32 = arith.constant 0 : i32
    %c0_i32_0 = arith.constant 0 : i32
    return %arg0, %c0_i32 : i32, i32
  }
  func.func @transform_4(%arg0: i32, %arg1: i32) -> (i32, i32) {
    %c0_i32 = arith.constant 0 : i32
    %c0_i32_0 = arith.constant 0 : i32
    return %arg0, %c0_i32 : i32, i32
  }
}

</mosaic_0001>

<llo_original>
// kernel: ntxent_loss_poly.1
$region0: #{ntxent_loss_poly.1}
  #allocation0 [shape = 'u32[]', space=smem, size = 0x4, offset = 0x4, fixed_abs, tag = 'smem constant byte address 0x4 - core index']
  #allocation1 [shape = 'u32[72,128]{1,0:T(1,128)}', space=vmem, size = 0x9000, scoped, tag = 'internal scratch']
  #allocation2 [shape = 'f32[64,1]{1,0:T(8,128)}', space=vmem, size = 0x8000, scoped, tag = 'scratch operand']
  #allocation3 [shape = 'f32[64,1]{1,0:T(8,128)}', space=vmem, size = 0x8000, scoped, tag = 'scratch operand']
  %s0 = inlined_call_operand.vmem [shape: bf16[128,128], index: 0, kind: input, shape index: {}, may-alias: {0,1}]
  %s1 = inlined_call_operand.vmem [shape: bf16[128,128], index: 1, kind: input, shape index: {}, may-alias: {0,1}]
  %s2 = inlined_call_operand.vmem [shape: f32[128,1], index: 2, kind: input, shape index: {}]
  %s3 = inlined_call_operand.vmem [shape: f32[128,1], index: 3, kind: output, shape index: {0}]
  %s4 = inlined_call_operand.vmem [shape: f32[128,1], index: 4, kind: output, shape index: {1}]
  %5 = xla_tuple %s3, %s4
  %s6 = sld [smem:[#allocation0]]
  $region61: #{ntxent_loss_poly.1} parent=0
    _
  %s8 = ssub.s32 1, %s6
  %s9 = scalar_select 0, %s8, %s6
  loop: start=0, step=1, limit=4
  $region2: #{ntxent_loss_poly.1} parent=0 // loop_pre_header
    _
  $region3: #{ntxent_loss_poly.1} parent=0 // loop_header
    %s11 = sphi 0, %s15
    %p12 = scmp.ge.s32.totalorder %s11, 4
    %s18 = sphi 0, %s30
    %s19 = sphi 0, %s26
    %s20 = sphi 0, %s18
    %s21 = sphi 0, %s19
    %s22 = sphi 0, %s20
    %s23 = sphi 0, %s21
    %s33 = sphi 0, %s35
    %s36 = sphi 0, %s33
    %s37 = sphi 0, %s36
    %s53 = sphi 0, %s37
    %s57 = sphi 0, %s57
    %s59 = sphi 0, %s57
    %s60 = sphi 0, %s59
    %s74 = sphi 0, %s60
    %s80 = sphi 0, %s82
    %s83 = sphi 0, %s80
    %s84 = sphi 0, %s83
    %s100 = sphi 0, %s84
    %s106 = sphi 0, %s108
    %s109 = sphi 0, %s106
    %s110 = sphi 0, %s109
    %s126 = sphi 0, %s110
    %s132 = sphi 0, %s134
    %s135 = sphi 0, %s132
    %s136 = sphi 0, %s135
    %s152 = sphi 0, %s136
  $region4: #{ntxent_loss_poly.1} parent=0 // loop_header_branch
    %14 = sbr.rel (%p12) target = $region8
  $region5: #{ntxent_loss_poly.1} parent=0 // loop_body
    %s16 = ssub.s32 %s11, 1
    %s17 = ssub.s32 %s11, 2
    %s24 = sadd.s32 1, %s19
    %p25 = scmp.ge.s32.totalorder %s24, 1
    %s26 = scalar_select %p25, 0, %s24
    %s27 = sadd.s32 1, %s18
    %s28 = scalar_select %p25, %s27, %s18
    %p29 = scmp.ge.s32.totalorder %s28, 2
    %s30 = scalar_select %p29, 0, %s28
    %s31 = ssub.s32 %s18, %s30
    %p32 = scmp.eq.s32.totalorder %s31, 0
    %s34 = sadd.s32 %s33, 1
    %s35 = scalar_select %p32, %s33, %s34
    %p38 = pneg %p32
    %p39 = scmp.eq.s32.totalorder %s11, 1
    %p40 = por %p38, %p39
    %p41 = scmp.ne.s32.totalorder %s33, %s36
    %p42 = scmp.eq.s32.totalorder %s11, 0
    %p43 = por %p41, %p42
    %p44 = scmp.ne.s32.totalorder %s33, %s36
    %p45 = scmp.eq.s32.totalorder %s16, 1
    %p46 = por %p44, %p45
    %p47 = scmp.ne.s32.totalorder %s36, %s37
    %p48 = scmp.eq.s32.totalorder %s16, 0
    %p49 = por %p47, %p48
    %p50 = scmp.ne.s32.totalorder %s36, %s37
    %p51 = scmp.eq.s32.totalorder %s17, 1
    %p52 = por %p50, %p51
    %p54 = scmp.ne.s32.totalorder %s37, %s53
    %p55 = scmp.eq.s32.totalorder %s17, 0
    %p56 = por %p54, %p55
    %s58 = sadd.s32 %s57, 1
    %p61 = scmp.eq.s32.totalorder %s11, 1
    %p62 = scmp.ne.s32.totalorder %s57, %s59
    %p63 = scmp.eq.s32.totalorder %s11, 0
    %p64 = por %p62, %p63
    %p65 = scmp.ne.s32.totalorder %s57, %s59
    %p66 = scmp.eq.s32.totalorder %s16, 1
    %p67 = por %p65, %p66
    %p68 = scmp.ne.s32.totalorder %s59, %s60
    %p69 = scmp.eq.s32.totalorder %s16, 0
    %p70 = por %p68, %p69
    %p71 = scmp.ne.s32.totalorder %s59, %s60
    %p72 = scmp.eq.s32.totalorder %s17, 1
    %p73 = por %p71, %p72
    %p75 = scmp.ne.s32.totalorder %s60, %s74
    %p76 = scmp.eq.s32.totalorder %s17, 0
    %p77 = por %p75, %p76
    %s78 = ssub.s32 %s18, %s30
    %p79 = scmp.eq.s32.totalorder %s78, 0
    %s81 = sadd.s32 %s80, 1
    %s82 = scalar_select %p79, %s80, %s81
    %p85 = pneg %p79
    %p86 = scmp.eq.s32.totalorder %s11, 1
    %p87 = por %p85, %p86
    %p88 = scmp.ne.s32.totalorder %s80, %s83
    %p89 = scmp.eq.s32.totalorder %s11, 0
    %p90 = por %p88, %p89
    %p91 = scmp.ne.s32.totalorder %s80, %s83
    %p92 = scmp.eq.s32.totalorder %s16, 1
    %p93 = por %p91, %p92
    %p94 = scmp.ne.s32.totalorder %s83, %s84
    %p95 = scmp.eq.s32.totalorder %s16, 0
    %p96 = por %p94, %p95
    %p97 = scmp.ne.s32.totalorder %s83, %s84
    %p98 = scmp.eq.s32.totalorder %s17, 1
    %p99 = por %p97, %p98
    %p101 = scmp.ne.s32.totalorder %s84, %s100
    %p102 = scmp.eq.s32.totalorder %s17, 0
    %p103 = por %p101, %p102
    %s104 = ssub.s32 %s18, %s30
    %p105 = scmp.eq.s32.totalorder %s104, 0
    %s107 = sadd.s32 %s106, 1
    %s108 = scalar_select %p105, %s106, %s107
    %p111 = pneg %p105
    %p112 = scmp.eq.s32.totalorder %s11, 1
    %p113 = por %p111, %p112
    %p114 = scmp.ne.s32.totalorder %s106, %s109
    %p115 = scmp.eq.s32.totalorder %s11, 0
    %p116 = por %p114, %p115
    %p117 = scmp.ne.s32.totalorder %s106, %s109
    %p118 = scmp.eq.s32.totalorder %s16, 1
    %p119 = por %p117, %p118
    %p120 = scmp.ne.s32.totalorder %s109, %s110
    %p121 = scmp.eq.s32.totalorder %s16, 0
    %p122 = por %p120, %p121
    %p123 = scmp.ne.s32.totalorder %s109, %s110
    %p124 = scmp.eq.s32.totalorder %s17, 1
    %p125 = por %p123, %p124
    %p127 = scmp.ne.s32.totalorder %s110, %s126
    %p128 = scmp.eq.s32.totalorder %s17, 0
    %p129 = por %p127, %p128
    %s130 = ssub.s32 %s18, %s30
    %p131 = scmp.eq.s32.totalorder %s130, 0
    %s133 = sadd.s32 %s132, 1
    %s134 = scalar_select %p131, %s132, %s133
    %p137 = pneg %p131
    %p138 = scmp.eq.s32.totalorder %s11, 1
    %p139 = por %p137, %p138
    %p140 = scmp.ne.s32.totalorder %s132, %s135
    %p141 = scmp.eq.s32.totalorder %s11, 0
    %p142 = por %p140, %p141
    %p143 = scmp.ne.s32.totalorder %s132, %s135
    %p144 = scmp.eq.s32.totalorder %s16, 1
    %p145 = por %p143, %p144
    %p146 = scmp.ne.s32.totalorder %s135, %s136
    %p147 = scmp.eq.s32.totalorder %s16, 0
    %p148 = por %p146, %p147
    %p149 = scmp.ne.s32.totalorder %s135, %s136
    %p150 = scmp.eq.s32.totalorder %s17, 1
    %p151 = por %p149, %p150
    %p153 = scmp.ne.s32.totalorder %s136, %s152
    %p154 = scmp.eq.s32.totalorder %s17, 0
    %p155 = por %p153, %p154
    %p156 = scmp.le.s32.totalorder 1, %s11
    %p157 = scmp.lt.s32.totalorder %s11, 3
    %p158 = pnand %p156, %p157
    %p159 = pneg %p158
    // Predicated region
    $region9: #{ntxent_loss_poly.1} parent=5 // pred_check
      _
    $region10: #{ntxent_loss_poly.1} parent=5 // pred_check_branch
      %161 = sbr.rel (%p158) target = $region12
    $region11: #{ntxent_loss_poly.1} parent=5 // pred_region
      %s162 = ssub.s32 %s11, 1
      // Predicated region
      $region13: #{ntxent_loss_poly.1} parent=11 // pred_check
        %p163 = pneg %p70
      $region14: #{ntxent_loss_poly.1} parent=11 // pred_check_branch
        %165 = sbr.rel (%p163) target = $region16
      $region15: #{ntxent_loss_poly.1} parent=11 // pred_region
        _
      $region16: #{ntxent_loss_poly.1} parent=11 // pred_fallthru
        _
    $region12: #{ntxent_loss_poly.1} parent=5 // pred_fallthru
      _
    %p166 = scmp.lt.s32.totalorder %s11, 2
    // Predicated region
    $region17: #{ntxent_loss_poly.1} parent=5 // pred_check
      %p167 = pneg %p166
    $region18: #{ntxent_loss_poly.1} parent=5 // pred_check_branch
      %169 = sbr.rel (%p167) target = $region20
    $region19: #{ntxent_loss_poly.1} parent=5 // pred_region
      // Predicated region
      $region21: #{ntxent_loss_poly.1} parent=19 // pred_check
        %p170 = pneg %p43
      $region22: #{ntxent_loss_poly.1} parent=19 // pred_check_branch
        %172 = sbr.rel (%p170) target = $region24
      $region23: #{ntxent_loss_poly.1} parent=19 // pred_region
        %s173 = smul.u32 8, %s18
        %p174 = scmp.lt.s32.totalorder %s173, 15
        %s175 = scalar_select %p174, %s173, 15
        %s176 = smul.addr %s175, 4
        %s177 = scalar_lea.vmem %s0, %s176
        %s178 = smul.u32 8, %s18
      $region24: #{ntxent_loss_poly.1} parent=19 // pred_fallthru
        _
      // Predicated region
      $region25: #{ntxent_loss_poly.1} parent=19 // pred_check
        %p179 = pneg %p90
      $region26: #{ntxent_loss_poly.1} parent=19 // pred_check_branch
        %181 = sbr.rel (%p179) target = $region28
      $region27: #{ntxent_loss_poly.1} parent=19 // pred_region
        %s182 = smul.u32 8, %s18
        %p183 = scmp.lt.s32.totalorder %s182, 15
        %s184 = scalar_select %p183, %s182, 15
        %s185 = smul.addr %s184, 8
        %s186 = scalar_lea.vmem %s2, %s185
        %s187 = smul.u32 8, %s18
      $region28: #{ntxent_loss_poly.1} parent=19 // pred_fallthru
        _
    $region20: #{ntxent_loss_poly.1} parent=5 // pred_fallthru
      _
    %p188 = scmp.le.s32.totalorder 1, %s11
    %p189 = scmp.lt.s32.totalorder %s11, 3
    %p190 = pnand %p188, %p189
    %p191 = pneg %p190
    // Predicated region
    $region29: #{ntxent_loss_poly.1} parent=5 // pred_check
      _
    $region30: #{ntxent_loss_poly.1} parent=5 // pred_check_branch
      %193 = sbr.rel (%p190) target = $region32
    $region31: #{ntxent_loss_poly.1} parent=5 // pred_region
      %s194 = ssub.s32 %s11, 1
      %s195 = smul.u32 8, %s20
      %p196 = scmp.lt.s32.totalorder %s195, 15
      %s197 = scalar_select %p196, %s195, 15
      %s198 = smul.addr %s197, 4
      %s199 = scalar_lea.vmem %s0, %s198
      %p200 = pneg %p49
      %p201 = pneg %p46
      %p202 = pneg %p70
      %p203 = pneg %p67
      %s204 = smul.u32 8, %s20
      %p205 = scmp.lt.s32.totalorder %s204, 15
      %s206 = scalar_select %p205, %s204, 15
      %s207 = smul.addr %s206, 8
      %s208 = scalar_lea.vmem %s2, %s207
      %p209 = pneg %p96
      %p210 = pneg %p93
      %p211 = pneg %p122
      %p212 = pneg %p119
      %s213 = smul.u32 8, %s20
      %p214 = scmp.lt.s32.totalorder %s213, 15
      %s215 = scalar_select %p214, %s213, 15
      %s216 = smul.addr %s215, 8
      %s217 = scalar_lea.vmem %s3, %s216
      %p218 = pneg %p148
      %p219 = pneg %p145
      %s220 = smul.u32 8, %s20
      %p221 = scmp.lt.s32.totalorder %s220, 15
      %s222 = scalar_select %p221, %s220, 15
      %s223 = smul.addr %s222, 8
      %s224 = scalar_lea.vmem %s4, %s223
      %s225 = smul.u32 8, %s20
      %p226 = scmp.lt.s32.totalorder %s225, 15
      %s227 = scalar_select %p226, %s225, 15
      %s228 = smul.addr %s227, 4
      %s229 = scalar_lea.vmem %s0, %s228
      %s230 = smul.u32 8, %s20
      %s231 = smul.u32 8, %s20
      %p232 = scmp.lt.s32.totalorder %s231, 15
      %s233 = scalar_select %p232, %s231, 15
      %s234 = smul.addr %s233, 8
      %s235 = scalar_lea.vmem %s2, %s234
      %s236 = smul.u32 8, %s20
      %s237 = smul.u32 8, %s20
      %p238 = scmp.lt.s32.totalorder %s237, 15
      %s239 = scalar_select %p238, %s237, 15
      %s240 = smul.addr %s239, 8
      %s241 = scalar_lea.vmem %s3, %s240
      %s242 = smul.u32 8, %s20
      %s243 = smul.u32 8, %s20
      %p244 = scmp.lt.s32.totalorder %s243, 15
      %s245 = scalar_select %p244, %s243, 15
      %s246 = smul.addr %s245, 8
      %s247 = scalar_lea.vmem %s4, %s246
      %s248 = smul.u32 8, %s20
      %p249 = scmp.eq.s32.totalorder %s21, 0
      // Predicated region
      $region33: #{ntxent_loss_poly.1} parent=31 // pred_check
        %p250 = pneg %p249
      $region34: #{ntxent_loss_poly.1} parent=31 // pred_check_branch
        %252 = sbr.rel (%p250) target = $region36
      $region35: #{ntxent_loss_poly.1} parent=31 // pred_region
        %vm253 = vcmask 7168
        %254 = vst.msk [vmem:[#allocation2] sm:$0xff] %vm253, -inf
        %255 = vst.msk [vmem:[#allocation2 + $0x8] sm:$0xff] %vm253, -inf
        %256 = vst.msk [vmem:[#allocation2 + $0x10] sm:$0xff] %vm253, -inf
        %257 = vst.msk [vmem:[#allocation2 + $0x18] sm:$0xff] %vm253, -inf
        %258 = vst.msk [vmem:[#allocation2 + $0x20] sm:$0xff] %vm253, -inf
        %259 = vst.msk [vmem:[#allocation2 + $0x28] sm:$0xff] %vm253, -inf
        %260 = vst.msk [vmem:[#allocation2 + $0x30] sm:$0xff] %vm253, -inf
        %261 = vst.msk [vmem:[#allocation2 + $0x38] sm:$0xff] %vm253, -inf
        %262 = vst.msk [vmem:[#allocation3] sm:$0xff] %vm253, 0.0
        %263 = vst.msk [vmem:[#allocation3 + $0x8] sm:$0xff] %vm253, 0.0
        %264 = vst.msk [vmem:[#allocation3 + $0x10] sm:$0xff] %vm253, 0.0
        %265 = vst.msk [vmem:[#allocation3 + $0x18] sm:$0xff] %vm253, 0.0
        %266 = vst.msk [vmem:[#allocation3 + $0x20] sm:$0xff] %vm253, 0.0
        %267 = vst.msk [vmem:[#allocation3 + $0x28] sm:$0xff] %vm253, 0.0
        %268 = vst.msk [vmem:[#allocation3 + $0x30] sm:$0xff] %vm253, 0.0
        %269 = vst.msk [vmem:[#allocation3 + $0x38] sm:$0xff] %vm253, 0.0
      $region36: #{ntxent_loss_poly.1} parent=31 // pred_fallthru
        _
      %s270 = smul.u32 %s21, 128
      %s271 = sshra.s32 %s270, 3
      %s272 = sand.u32 %s270, 7
      %s273 = smul.addr %s271, 4
      %s274 = scalar_lea.vmem %s1, %s273
      %v275 = vld [vmem:[%s274] sm:$0xf]
      %v276 = vld [vmem:[%s274 + $0x4] sm:$0xf]
      %v277 = vld [vmem:[%s274 + $0x8] sm:$0xf]
      %v278 = vld [vmem:[%s274 + $0xc] sm:$0xf]
      %v279 = vld [vmem:[%s274 + $0x10] sm:$0xf]
      %v280 = vld [vmem:[%s274 + $0x14] sm:$0xf]
      %v281 = vld [vmem:[%s274 + $0x18] sm:$0xf]
      %v282 = vld [vmem:[%s274 + $0x1c] sm:$0xf]
      %v283 = vld [vmem:[%s274 + $0x20] sm:$0xf]
      %v284 = vld [vmem:[%s274 + $0x24] sm:$0xf]
      %v285 = vld [vmem:[%s274 + $0x28] sm:$0xf]
      %v286 = vld [vmem:[%s274 + $0x2c] sm:$0xf]
      %v287 = vld [vmem:[%s274 + $0x30] sm:$0xf]
      %v288 = vld [vmem:[%s274 + $0x34] sm:$0xf]
      %v289 = vld [vmem:[%s274 + $0x38] sm:$0xf]
      %v290 = vld [vmem:[%s274 + $0x3c] sm:$0xf]
      %v291 = vld [vmem:[%s229] sm:$0xf]
      %v292 = vld [vmem:[%s229 + $0x4] sm:$0xf]
      %v293 = vld [vmem:[%s229 + $0x8] sm:$0xf]
      %v294 = vld [vmem:[%s229 + $0xc] sm:$0xf]
      %v295 = vld [vmem:[%s229 + $0x10] sm:$0xf]
      %v296 = vld [vmem:[%s229 + $0x14] sm:$0xf]
      %v297 = vld [vmem:[%s229 + $0x18] sm:$0xf]
      %v298 = vld [vmem:[%s229 + $0x1c] sm:$0xf]
      %v307 = vunpack.c.l.b16 %v291
      %v308 = vunpack.c.l.b16 %v292
      %v309 = vunpack.c.l.b16 %v293
      %v310 = vunpack.c.l.b16 %v294
      %v311 = vunpack.c.l.b16 %v295
      %v312 = vunpack.c.l.b16 %v296
      %v313 = vunpack.c.l.b16 %v297
      %v314 = vunpack.c.l.b16 %v298
      %v315 = vpack.c.b16 %v308, %v307
      %v316 = vpack.c.b16 %v310, %v309
      %v317 = vpack.c.b16 %v312, %v311
      %v318 = vpack.c.b16 %v314, %v313
      %v339 = vunpack.c.l.b16 %v275
      %v340 = vunpack.c.l.b16 %v276
      %v341 = vunpack.c.l.b16 %v277
      %v342 = vunpack.c.l.b16 %v278
      %v343 = vunpack.c.l.b16 %v279
      %v344 = vunpack.c.l.b16 %v280
      %v345 = vunpack.c.l.b16 %v281
      %v346 = vunpack.c.l.b16 %v282
      %v347 = vunpack.c.l.b16 %v283
      %v348 = vunpack.c.l.b16 %v284
      %v349 = vunpack.c.l.b16 %v285
      %v350 = vunpack.c.l.b16 %v286
      %v351 = vunpack.c.l.b16 %v287
      %v352 = vunpack.c.l.b16 %v288
      %v353 = vunpack.c.l.b16 %v289
      %v354 = vunpack.c.l.b16 %v290
      %v355 = vpack.c.b16 %v340, %v339
      %v356 = vpack.c.b16 %v342, %v341
      %v357 = vpack.c.b16 %v344, %v343
      %v358 = vpack.c.b16 %v346, %v345
      %v359 = vpack.c.b16 %v348, %v347
      %v360 = vpack.c.b16 %v350, %v349
      %v361 = vpack.c.b16 %v352, %v351
      %v362 = vpack.c.b16 %v354, %v353
      %371 = vmatpush.bf16.xpose.msra.mxu0 %v362
      %372 = vmatpush.bf16.xpose.msra.mxu0 %v361
      %373 = vmatpush.bf16.xpose.msra.mxu0 %v360
      %374 = vmatpush.bf16.xpose.msra.mxu0 %v359
      %375 = vmatpush.bf16.xpose.msra.mxu0 %v358
      %376 = vmatpush.bf16.xpose.msra.mxu0 %v357
      %377 = vmatpush.bf16.xpose.msra.mxu0 %v356
      %378 = vmatpush.bf16.xpose.msra.mxu0 %v355
      %379 = vmatmul.bf16.gmra.mxu0 %v315
      %v380 = vpop.f32.mrf.mxu0
      %v381 = vadd.f32 0.0, %v380
      %v382 = vpop.f32.mrf.mxu0
      %v383 = vadd.f32 0.0, %v382
      %384 = vmatmul.bf16.gmra.mxu0 %v316
      %v385 = vpop.f32.mrf.mxu0
      %v386 = vadd.f32 0.0, %v385
      %v387 = vpop.f32.mrf.mxu0
      %v388 = vadd.f32 0.0, %v387
      %389 = vmatmul.bf16.gmra.mxu0 %v317
      %v390 = vpop.f32.mrf.mxu0
      %v391 = vadd.f32 0.0, %v390
      %v392 = vpop.f32.mrf.mxu0
      %v393 = vadd.f32 0.0, %v392
      %394 = vmatmul.bf16.gmra.mxu0 %v318
      %v395 = vpop.f32.mrf.mxu0
      %v396 = vadd.f32 0.0, %v395
      %v397 = vpop.f32.mrf.mxu0
      %v398 = vadd.f32 0.0, %v397
      %399 = vdwg.mxu0
      %v400 = vmul.f32 %v381, 2.0
      %v401 = vmul.f32 %v383, 2.0
      %v402 = vmul.f32 %v386, 2.0
      %v403 = vmul.f32 %v388, 2.0
      %v404 = vmul.f32 %v391, 2.0
      %v405 = vmul.f32 %v393, 2.0
      %v406 = vmul.f32 %v396, 2.0
      %v407 = vmul.f32 %v398, 2.0
      %s408 = smul.u32 %s20, 64
      %v409 = vlaneseq
      %v410 = vshrl.u32 %v409, 7
      %v411 = vadd.s32 %v410, 8
      %v412 = vadd.s32 %v410, 16
      %v413 = vadd.s32 %v410, 24
      %v414 = vadd.s32 %v410, 32
      %v415 = vadd.s32 %v410, 40
      %v416 = vadd.s32 %v410, 48
      %v417 = vadd.s32 %v410, 56
      %v418 = vstv %s408
      %v419 = vadd.s32 %v418, %v410
      %v420 = vadd.s32 %v418, %v411
      %v421 = vadd.s32 %v418, %v412
      %v422 = vadd.s32 %v418, %v413
      %v423 = vadd.s32 %v418, %v414
      %v424 = vadd.s32 %v418, %v415
      %v425 = vadd.s32 %v418, %v416
      %v426 = vadd.s32 %v418, %v417
      %v427 = vlaneseq
      %v428 = vand.u32 %v427, 127
      %v429 = vstv %s270
      %v430 = vadd.s32 %v429, %v428
      %vm431 = vcmp.eq.s32.totalorder %v419, %v430
      %vm432 = vcmp.eq.s32.totalorder %v420, %v430
      %vm433 = vcmp.eq.s32.totalorder %v421, %v430
      %vm434 = vcmp.eq.s32.totalorder %v422, %v430
      %vm435 = vcmp.eq.s32.totalorder %v423, %v430
      %vm436 = vcmp.eq.s32.totalorder %v424, %v430
      %vm437 = vcmp.eq.s32.totalorder %v425, %v430
      %vm438 = vcmp.eq.s32.totalorder %v426, %v430
      %vm439 = vcmp.ge.s32.totalorder %v430, 16
      %v440 = vsel %vm439, 1, 0
      %vm441 = vcmp.eq.s32.totalorder %v440, 1
      %vm442 = vmor %vm431, %vm441
      %vm443 = vmor %vm432, %vm441
      %vm444 = vmor %vm433, %vm441
      %vm445 = vmor %vm434, %vm441
      %vm446 = vmor %vm435, %vm441
      %vm447 = vmor %vm436, %vm441
      %vm448 = vmor %vm437, %vm441
      %vm449 = vmor %vm438, %vm441
      %v450 = vsel %vm442, -1e+30, %v400
      %v451 = vsel %vm443, -1e+30, %v401
      %v452 = vsel %vm444, -1e+30, %v402
      %v453 = vsel %vm445, -1e+30, %v403
      %v454 = vsel %vm446, -1e+30, %v404
      %v455 = vsel %vm447, -1e+30, %v405
      %v456 = vsel %vm448, -1e+30, %v406
      %v457 = vsel %vm449, -1e+30, %v407
      %v458 = vld [vmem:[#allocation2] sm:$0xff]
      %v459 = vld [vmem:[#allocation2 + $0x8] sm:$0xff]
      %v460 = vld [vmem:[#allocation2 + $0x10] sm:$0xff]
      %v461 = vld [vmem:[#allocation2 + $0x18] sm:$0xff]
      %v462 = vld [vmem:[#allocation2 + $0x20] sm:$0xff]
      %v463 = vld [vmem:[#allocation2 + $0x28] sm:$0xff]
      %v464 = vld [vmem:[#allocation2 + $0x30] sm:$0xff]
      %v465 = vld [vmem:[#allocation2 + $0x38] sm:$0xff]
      %466 = vmax.xlane.f32.xlu0 %v450
      %v467 = vpop.xlane.xlu0 %466
      %468 = vmax.xlane.f32.xlu0 %v451
      %v469 = vpop.xlane.xlu0 %468
      %470 = vmax.xlane.f32.xlu0 %v452
      %v471 = vpop.xlane.xlu0 %470
      %472 = vmax.xlane.f32.xlu0 %v453
      %v473 = vpop.xlane.xlu0 %472
      %474 = vmax.xlane.f32.xlu0 %v454
      %v475 = vpop.xlane.xlu0 %474
      %476 = vmax.xlane.f32.xlu0 %v455
      %v477 = vpop.xlane.xlu0 %476
      %478 = vmax.xlane.f32.xlu0 %v456
      %v479 = vpop.xlane.xlu0 %478
      %480 = vmax.xlane.f32.xlu0 %v457
      %v481 = vpop.xlane.xlu0 %480
      %v482 = vmax.f32 %v458, %v467
      %v483 = vmax.f32 %v459, %v469
      %v484 = vmax.f32 %v460, %v471
      %v485 = vmax.f32 %v461, %v473
      %v486 = vmax.f32 %v462, %v475
      %v487 = vmax.f32 %v463, %v477
      %v488 = vmax.f32 %v464, %v479
      %v489 = vmax.f32 %v465, %v481
      %v490 = vsub.f32 %v458, %v482
      %v491 = vsub.f32 %v459, %v483
      %v492 = vsub.f32 %v460, %v484
      %v493 = vsub.f32 %v461, %v485
      %v494 = vsub.f32 %v462, %v486
      %v495 = vsub.f32 %v463, %v487
      %v496 = vsub.f32 %v464, %v488
      %v497 = vsub.f32 %v465, %v489
      %v498 = vmul.f32 %v490, 1.442695
      %v499 = vpow.pop %v498
      %v500 = vmul.f32 %v491, 1.442695
      %v501 = vpow.pop %v500
      %v502 = vmul.f32 %v492, 1.442695
      %v503 = vpow.pop %v502
      %v504 = vmul.f32 %v493, 1.442695
      %v505 = vpow.pop %v504
      %v506 = vmul.f32 %v494, 1.442695
      %v507 = vpow.pop %v506
      %v508 = vmul.f32 %v495, 1.442695
      %v509 = vpow.pop %v508
      %v510 = vmul.f32 %v496, 1.442695
      %v511 = vpow.pop %v510
      %v512 = vmul.f32 %v497, 1.442695
      %v513 = vpow.pop %v512
      %v514 = vld [vmem:[#allocation3] sm:$0xff]
      %v515 = vld [vmem:[#allocation3 + $0x8] sm:$0xff]
      %v516 = vld [vmem:[#allocation3 + $0x10] sm:$0xff]
      %v517 = vld [vmem:[#allocation3 + $0x18] sm:$0xff]
      %v518 = vld [vmem:[#allocation3 + $0x20] sm:$0xff]
      %v519 = vld [vmem:[#allocation3 + $0x28] sm:$0xff]
      %v520 = vld [vmem:[#allocation3 + $0x30] sm:$0xff]
      %v521 = vld [vmem:[#allocation3 + $0x38] sm:$0xff]
      %v522 = vmul.f32 %v499, %v514
      %v523 = vmul.f32 %v501, %v515
      %v524 = vmul.f32 %v503, %v516
      %v525 = vmul.f32 %v505, %v517
      %v526 = vmul.f32 %v507, %v518
      %v527 = vmul.f32 %v509, %v519
      %v528 = vmul.f32 %v511, %v520
      %v529 = vmul.f32 %v513, %v521
      %531 = vset.pattern.permute.xlu0 0
      %532 = vperm.xlu0 %531, %v482
      %v533 = vpop.permute.xlu0 %532
      %536 = vset.pattern.permute.xlu0 0
      %537 = vperm.xlu0 %536, %v483
      %v538 = vpop.permute.xlu0 %537
      %541 = vset.pattern.permute.xlu0 0
      %542 = vperm.xlu0 %541, %v484
      %v543 = vpop.permute.xlu0 %542
      %546 = vset.pattern.permute.xlu0 0
      %547 = vperm.xlu0 %546, %v485
      %v548 = vpop.permute.xlu0 %547
      %551 = vset.pattern.permute.xlu0 0
      %552 = vperm.xlu0 %551, %v486
      %v553 = vpop.permute.xlu0 %552
      %556 = vset.pattern.permute.xlu0 0
      %557 = vperm.xlu0 %556, %v487
      %v558 = vpop.permute.xlu0 %557
      %561 = vset.pattern.permute.xlu0 0
      %562 = vperm.xlu0 %561, %v488
      %v563 = vpop.permute.xlu0 %562
      %566 = vset.pattern.permute.xlu0 0
      %567 = vperm.xlu0 %566, %v489
      %v568 = vpop.permute.xlu0 %567
      %v570 = vsub.f32 %v450, %v533
      %v571 = vsub.f32 %v451, %v538
      %v572 = vsub.f32 %v452, %v543
      %v573 = vsub.f32 %v453, %v548
      %v574 = vsub.f32 %v454, %v553
      %v575 = vsub.f32 %v455, %v558
      %v576 = vsub.f32 %v456, %v563
      %v577 = vsub.f32 %v457, %v568
      %v578 = vmul.f32 %v570, 1.442695
      %v579 = vpow.pop %v578
      %v580 = vmul.f32 %v571, 1.442695
      %v581 = vpow.pop %v580
      %v582 = vmul.f32 %v572, 1.442695
      %v583 = vpow.pop %v582
      %v584 = vmul.f32 %v573, 1.442695
      %v585 = vpow.pop %v584
      %v586 = vmul.f32 %v574, 1.442695
      %v587 = vpow.pop %v586
      %v588 = vmul.f32 %v575, 1.442695
      %v589 = vpow.pop %v588
      %v590 = vmul.f32 %v576, 1.442695
      %v591 = vpow.pop %v590
      %v592 = vmul.f32 %v577, 1.442695
      %v593 = vpow.pop %v592
      %594 = vadd.xlane.f32.xlu0 %v579
      %v595 = vpop.xlane.xlu0 %594
      %596 = vadd.xlane.f32.xlu0 %v581
      %v597 = vpop.xlane.xlu0 %596
      %598 = vadd.xlane.f32.xlu0 %v583
      %v599 = vpop.xlane.xlu0 %598
      %600 = vadd.xlane.f32.xlu0 %v585
      %v601 = vpop.xlane.xlu0 %600
      %602 = vadd.xlane.f32.xlu0 %v587
      %v603 = vpop.xlane.xlu0 %602
      %604 = vadd.xlane.f32.xlu0 %v589
      %v605 = vpop.xlane.xlu0 %604
      %606 = vadd.xlane.f32.xlu0 %v591
      %v607 = vpop.xlane.xlu0 %606
      %608 = vadd.xlane.f32.xlu0 %v593
      %v609 = vpop.xlane.xlu0 %608
      %v610 = vadd.f32 %v522, %v595
      %v611 = vadd.f32 %v523, %v597
      %v612 = vadd.f32 %v524, %v599
      %v613 = vadd.f32 %v525, %v601
      %v614 = vadd.f32 %v526, %v603
      %v615 = vadd.f32 %v527, %v605
      %v616 = vadd.f32 %v528, %v607
      %v617 = vadd.f32 %v529, %v609
      %vm618 = vcmask 7168
      %619 = vst.msk [vmem:[#allocation3] sm:$0xff] %vm618, %v610
      %620 = vst.msk [vmem:[#allocation3 + $0x8] sm:$0xff] %vm618, %v611
      %621 = vst.msk [vmem:[#allocation3 + $0x10] sm:$0xff] %vm618, %v612
      %622 = vst.msk [vmem:[#allocation3 + $0x18] sm:$0xff] %vm618, %v613
      %623 = vst.msk [vmem:[#allocation3 + $0x20] sm:$0xff] %vm618, %v614
      %624 = vst.msk [vmem:[#allocation3 + $0x28] sm:$0xff] %vm618, %v615
      %625 = vst.msk [vmem:[#allocation3 + $0x30] sm:$0xff] %vm618, %v616
      %626 = vst.msk [vmem:[#allocation3 + $0x38] sm:$0xff] %vm618, %v617
      %627 = vst.msk [vmem:[#allocation2] sm:$0xff] %vm618, %v482
      %628 = vst.msk [vmem:[#allocation2 + $0x8] sm:$0xff] %vm618, %v483
      %629 = vst.msk [vmem:[#allocation2 + $0x10] sm:$0xff] %vm618, %v484
      %630 = vst.msk [vmem:[#allocation2 + $0x18] sm:$0xff] %vm618, %v485
      %631 = vst.msk [vmem:[#allocation2 + $0x20] sm:$0xff] %vm618, %v486
      %632 = vst.msk [vmem:[#allocation2 + $0x28] sm:$0xff] %vm618, %v487
      %633 = vst.msk [vmem:[#allocation2 + $0x30] sm:$0xff] %vm618, %v488
      %634 = vst.msk [vmem:[#allocation2 + $0x38] sm:$0xff] %vm618, %v489
      // Predicated region
      $region37: #{ntxent_loss_poly.1} parent=31 // pred_check
        %p635 = pneg %p249
      $region38: #{ntxent_loss_poly.1} parent=31 // pred_check_branch
        %637 = sbr.rel (%p635) target = $region40
      $region39: #{ntxent_loss_poly.1} parent=31 // pred_region
        %v638 = vld [vmem:[%s235] sm:$0xff]
        %v639 = vld [vmem:[%s235 + $0x8] sm:$0xff]
        %v640 = vld [vmem:[%s235 + $0x10] sm:$0xff]
        %v641 = vld [vmem:[%s235 + $0x18] sm:$0xff]
        %v642 = vld [vmem:[%s235 + $0x20] sm:$0xff]
        %v643 = vld [vmem:[%s235 + $0x28] sm:$0xff]
        %v644 = vld [vmem:[%s235 + $0x30] sm:$0xff]
        %v645 = vld [vmem:[%s235 + $0x38] sm:$0xff]
        %v646 = vld [vmem:[#allocation2] sm:$0xff]
        %v647 = vld [vmem:[#allocation2 + $0x8] sm:$0xff]
        %v648 = vld [vmem:[#allocation2 + $0x10] sm:$0xff]
        %v649 = vld [vmem:[#allocation2 + $0x18] sm:$0xff]
        %v650 = vld [vmem:[#allocation2 + $0x20] sm:$0xff]
        %v651 = vld [vmem:[#allocation2 + $0x28] sm:$0xff]
        %v652 = vld [vmem:[#allocation2 + $0x30] sm:$0xff]
        %v653 = vld [vmem:[#allocation2 + $0x38] sm:$0xff]
        %v654 = vld [vmem:[#allocation3] sm:$0xff]
        %v655 = vld [vmem:[#allocation3 + $0x8] sm:$0xff]
        %v656 = vld [vmem:[#allocation3 + $0x10] sm:$0xff]
        %v657 = vld [vmem:[#allocation3 + $0x18] sm:$0xff]
        %v658 = vld [vmem:[#allocation3 + $0x20] sm:$0xff]
        %v659 = vld [vmem:[#allocation3 + $0x28] sm:$0xff]
        %v660 = vld [vmem:[#allocation3 + $0x30] sm:$0xff]
        %v661 = vld [vmem:[#allocation3 + $0x38] sm:$0xff]
        %v662 = vlog2.pop %v654
        %v663 = vmul.f32 %v662, 0.6931472
        %v664 = vlog2.pop %v655
        %v665 = vmul.f32 %v664, 0.6931472
        %v666 = vlog2.pop %v656
        %v667 = vmul.f32 %v666, 0.6931472
        %v668 = vlog2.pop %v657
        %v669 = vmul.f32 %v668, 0.6931472
        %v670 = vlog2.pop %v658
        %v671 = vmul.f32 %v670, 0.6931472
        %v672 = vlog2.pop %v659
        %v673 = vmul.f32 %v672, 0.6931472
        %v674 = vlog2.pop %v660
        %v675 = vmul.f32 %v674, 0.6931472
        %v676 = vlog2.pop %v661
        %v677 = vmul.f32 %v676, 0.6931472
        %v678 = vsub.f32 %v646, %v638
        %v679 = vsub.f32 %v647, %v639
        %v680 = vsub.f32 %v648, %v640
        %v681 = vsub.f32 %v649, %v641
        %v682 = vsub.f32 %v650, %v642
        %v683 = vsub.f32 %v651, %v643
        %v684 = vsub.f32 %v652, %v644
        %v685 = vsub.f32 %v653, %v645
        %v686 = vadd.f32 %v678, %v663
        %v687 = vadd.f32 %v679, %v665
        %v688 = vadd.f32 %v680, %v667
        %v689 = vadd.f32 %v681, %v669
        %v690 = vadd.f32 %v682, %v671
        %v691 = vadd.f32 %v683, %v673
        %v692 = vadd.f32 %v684, %v675
        %v693 = vadd.f32 %v685, %v677
        %694 = vst.msk [vmem:[%s241] sm:$0xff] %vm618, %v686
        %695 = vst.msk [vmem:[%s241 + $0x8] sm:$0xff] %vm618, %v687
        %696 = vst.msk [vmem:[%s241 + $0x10] sm:$0xff] %vm618, %v688
        %697 = vst.msk [vmem:[%s241 + $0x18] sm:$0xff] %vm618, %v689
        %698 = vst.msk [vmem:[%s241 + $0x20] sm:$0xff] %vm618, %v690
        %699 = vst.msk [vmem:[%s241 + $0x28] sm:$0xff] %vm618, %v691
        %700 = vst.msk [vmem:[%s241 + $0x30] sm:$0xff] %vm618, %v692
        %701 = vst.msk [vmem:[%s241 + $0x38] sm:$0xff] %vm618, %v693
        %v702 = vsub.f32 %v638, %v646
        %v703 = vsub.f32 %v639, %v647
        %v704 = vsub.f32 %v640, %v648
        %v705 = vsub.f32 %v641, %v649
        %v706 = vsub.f32 %v642, %v650
        %v707 = vsub.f32 %v643, %v651
        %v708 = vsub.f32 %v644, %v652
        %v709 = vsub.f32 %v645, %v653
        %v710 = vsub.f32 %v702, %v663
        %v711 = vsub.f32 %v703, %v665
        %v712 = vsub.f32 %v704, %v667
        %v713 = vsub.f32 %v705, %v669
        %v714 = vsub.f32 %v706, %v671
        %v715 = vsub.f32 %v707, %v673
        %v716 = vsub.f32 %v708, %v675
        %v717 = vsub.f32 %v709, %v677
        %v718 = vmul.f32 %v710, 1.442695
        %v719 = vpow.pop %v718
        %v720 = vmul.f32 %v711, 1.442695
        %v721 = vpow.pop %v720
        %v722 = vmul.f32 %v712, 1.442695
        %v723 = vpow.pop %v722
        %v724 = vmul.f32 %v713, 1.442695
        %v725 = vpow.pop %v724
        %v726 = vmul.f32 %v714, 1.442695
        %v727 = vpow.pop %v726
        %v728 = vmul.f32 %v715, 1.442695
        %v729 = vpow.pop %v728
        %v730 = vmul.f32 %v716, 1.442695
        %v731 = vpow.pop %v730
        %v732 = vmul.f32 %v717, 1.442695
        %v733 = vpow.pop %v732
        %734 = vst.msk [vmem:[%s247] sm:$0xff] %vm618, %v719
        %735 = vst.msk [vmem:[%s247 + $0x8] sm:$0xff] %vm618, %v721
        %736 = vst.msk [vmem:[%s247 + $0x10] sm:$0xff] %vm618, %v723
        %737 = vst.msk [vmem:[%s247 + $0x18] sm:$0xff] %vm618, %v725
        %738 = vst.msk [vmem:[%s247 + $0x20] sm:$0xff] %vm618, %v727
        %739 = vst.msk [vmem:[%s247 + $0x28] sm:$0xff] %vm618, %v729
        %740 = vst.msk [vmem:[%s247 + $0x30] sm:$0xff] %vm618, %v731
        %741 = vst.msk [vmem:[%s247 + $0x38] sm:$0xff] %vm618, %v733
      $region40: #{ntxent_loss_poly.1} parent=31 // pred_fallthru
        _
      %s742 = smul.u32 8, %s20
      %p743 = scmp.lt.s32.totalorder %s742, 15
      %s744 = scalar_select %p743, %s742, 15
      %s745 = smul.addr %s744, 8
      %s746 = scalar_lea.vmem %s3, %s745
      %s747 = smul.u32 8, %s20
      %p748 = scmp.lt.s32.totalorder %s747, 15
      %s749 = scalar_select %p748, %s747, 15
      %s750 = smul.addr %s749, 8
      %s751 = scalar_lea.vmem %s4, %s750
      // Predicated region
      $region41: #{ntxent_loss_poly.1} parent=31 // pred_check
        %p752 = pneg %p119
      $region42: #{ntxent_loss_poly.1} parent=31 // pred_check_branch
        %754 = sbr.rel (%p752) target = $region44
      $region43: #{ntxent_loss_poly.1} parent=31 // pred_region
        %s755 = smul.u32 8, %s20
      $region44: #{ntxent_loss_poly.1} parent=31 // pred_fallthru
        _
      // Predicated region
      $region45: #{ntxent_loss_poly.1} parent=31 // pred_check
        %p756 = pneg %p145
      $region46: #{ntxent_loss_poly.1} parent=31 // pred_check_branch
        %758 = sbr.rel (%p756) target = $region48
      $region47: #{ntxent_loss_poly.1} parent=31 // pred_region
        %s759 = smul.u32 8, %s20
      $region48: #{ntxent_loss_poly.1} parent=31 // pred_fallthru
        _
    $region32: #{ntxent_loss_poly.1} parent=5 // pred_fallthru
      _
    %p760 = scmp.le.s32.totalorder 2, %s11
    // Predicated region
    $region49: #{ntxent_loss_poly.1} parent=5 // pred_check
      %p761 = pneg %p760
    $region50: #{ntxent_loss_poly.1} parent=5 // pred_check_branch
      %763 = sbr.rel (%p761) target = $region52
    $region51: #{ntxent_loss_poly.1} parent=5 // pred_region
      %s764 = ssub.s32 %s11, 2
      // Predicated region
      $region53: #{ntxent_loss_poly.1} parent=51 // pred_check
        %p765 = pneg %p125
      $region54: #{ntxent_loss_poly.1} parent=51 // pred_check_branch
        %767 = sbr.rel (%p765) target = $region56
      $region55: #{ntxent_loss_poly.1} parent=51 // pred_region
        %s768 = smul.u32 8, %s22
        %p769 = scmp.lt.s32.totalorder %s768, 15
        %s770 = scalar_select %p769, %s768, 15
        %s771 = smul.addr %s770, 8
        %s772 = scalar_lea.vmem %s3, %s771
      $region56: #{ntxent_loss_poly.1} parent=51 // pred_fallthru
        _
      // Predicated region
      $region57: #{ntxent_loss_poly.1} parent=51 // pred_check
        %p773 = pneg %p151
      $region58: #{ntxent_loss_poly.1} parent=51 // pred_check_branch
        %775 = sbr.rel (%p773) target = $region60
      $region59: #{ntxent_loss_poly.1} parent=51 // pred_region
        %s776 = smul.u32 8, %s22
        %p777 = scmp.lt.s32.totalorder %s776, 15
        %s778 = scalar_select %p777, %s776, 15
        %s779 = smul.addr %s778, 8
        %s780 = scalar_lea.vmem %s4, %s779
      $region60: #{ntxent_loss_poly.1} parent=51 // pred_fallthru
        _
    $region52: #{ntxent_loss_poly.1} parent=5 // pred_fallthru
      _
  $region6: #{ntxent_loss_poly.1} parent=0 // loop_footer
    %s15 = sadd.s32 1, %s11
  $region7: #{ntxent_loss_poly.1} parent=0 // loop_footer_branch
    %10 = sbr.rel target = $region3
  $region8: #{ntxent_loss_poly.1} parent=0 // loop_exit
    _

</llo_original>
